<compile_context>
chip_gen: v6e
topology: v6e:2x2x1
jax: 0.10.0
libtpu: 0.0.40
codegen_flags: <defaults>
</compile_context>

<pallas_src>
import jax
import jax.numpy as jnp
from jax import lax
from jax.experimental import pallas as pl
from jax.experimental.pallas import tpu as pltpu


def _round_up(x, m):
    return ((x + m - 1) // m) * m


def _make_kernel(action_dim):
    """Kernel over one batch tile.

    Inputs: state [tB, S], fused W1 [S, HP], fused block-diag W2 [HP, OPS],
    stacked biases [2, BW] (row 0 = layer-1 bias, row 1 = layer-2 bias).
    Output: [tB, OPS] with probs in cols < action_dim and value in col action_dim.
    """

    def kernel(state_ref, w1_ref, w2_ref, b_ref, out_ref):
        hp = w1_ref.shape[1]          # fused hidden width (multiple of 128)
        ops = w2_ref.shape[1]         # narrow fused output width (action_dim+1 -> mult of 8)
        wdt = w1_ref.dtype            # layer-1 matmul operand dtype (f32 or bf16)

        x = state_ref[...].astype(wdt)                         # [tB, S]

        # Fused layer 1: [actor_hidden | critic_hidden] in one MXU pass, f32 accumulate.
        h = jnp.dot(x, w1_ref[...], preferred_element_type=jnp.float32)
        h = jnp.maximum(h + b_ref[0:1, :hp], 0.0)              # bias + ReLU in f32

        # Fused layer 2 (block-diagonal), kept in f32: cheap, and keeps the critic
        # value at near-f32 precision even when layer 1 runs with bf16 operands.
        z = jnp.dot(h, w2_ref[...], preferred_element_type=jnp.float32)
        z = z + b_ref[1:2, :ops]                               # [tB, OPS]

        # Tiny [1, OPS] row iota broadcast against z (no full-tile iota / compares).
        col = lax.broadcasted_iota(jnp.int32, (1, ops), 1)

        # Masked, numerically-stable softmax over the logit columns only.
        logits = jnp.where(col < action_dim, z, -jnp.inf)
        m = jnp.max(logits, axis=-1, keepdims=True)
        e = jnp.exp(logits - m)                                # 0 at padded lanes
        probs = e / jnp.sum(e, axis=-1, keepdims=True)         # exact divide: rows sum to 1

        # Narrow store: probs in cols < A, value in col A, zeros in padded cols.
        out_ref[...] = jnp.where(col == action_dim, z, probs)

    return kernel


def fuse_params(raw, action_dim, hidden_dim, param_dtype=jnp.float32):
    """Pack the 8 per-layer tensors into 3 lane-friendly arrays (4 input DMAs total)."""
    h = hidden_dim
    s = raw["wa1"].shape[0]
    hp = _round_up(2 * h, 128)                  # fused hidden width
    ops = _round_up(action_dim + 1, 8)          # narrow fused output width
    bw = max(hp, ops)

    w1 = jnp.zeros((s, hp), jnp.float32)
    w1 = w1.at[:, :h].set(raw["wa1"]).at[:, h:2 * h].set(raw["wc1"])

    w2 = jnp.zeros((hp, ops), jnp.float32)
    w2 = w2.at[:h, :action_dim].set(raw["wa2"])
    w2 = w2.at[h:2 * h, action_dim].set(raw["wc2"][:, 0])

    b = jnp.zeros((2, bw), jnp.float32)
    b = b.at[0, :h].set(raw["ba1"][0]).at[0, h:2 * h].set(raw["bc1"][0])
    b = b.at[1, :action_dim].set(raw["ba2"][0]).at[1, action_dim].set(raw["bc2"][0, 0])

    return {
        "w1": w1.astype(param_dtype),  # optionally bf16: halves W1/state-path MXU operands
        "w2": w2,                      # layer 2 always f32 (critic value precision)
        "b": b,                        # biases f32 (post-accumulation adds)
        "action_dim": int(action_dim),
    }


def actor_critic_forward(state, fused, *, tile_b=2048):
    """state: [B, state_dim] f32 (or bf16); fused: output of fuse_params.
    Returns (action_probs [B, action_dim], value [B, 1])."""
    w1, w2, biases = fused["w1"], fused["w2"], fused["b"]
    action_dim = fused["action_dim"]
    B, S = state.shape
    OPS = w2.shape[1]

    # Batch tile: multiple of 8 sublanes, capped at 4096 (v5e 16 MiB scoped-VMEM default /
    # v7x 64 MiB physical headroom); pad B up to a multiple of the tile.
    tile = min(_round_up(B, 8), _round_up(min(tile_b, 4096), 8))
    Bp = _round_up(B, tile)
    if Bp != B:
        state = jnp.pad(state, ((0, Bp - B), (0, 0)))
    nb = Bp // tile

    def build(resident_pipeline_mode):
        rk = {} if resident_pipeline_mode is None else {"pipeline_mode": resident_pipeline_mode}
        return pl.pallas_call(
            _make_kernel(action_dim),
            out_shape=jax.ShapeDtypeStruct((Bp, OPS), jnp.float32),
            grid=(nb,),
            in_specs=[
                pl.BlockSpec((tile, S), lambda i: (i, 0)),         # state: tiled over batch
                pl.BlockSpec(w1.shape, lambda i: (0, 0), **rk),    # fused W1: resident
                pl.BlockSpec(w2.shape, lambda i: (0, 0), **rk),    # fused block-diag W2: resident
                pl.BlockSpec(biases.shape, lambda i: (0, 0), **rk),  # stacked biases: resident
            ],
            out_specs=pl.BlockSpec((tile, OPS), lambda i: (i, 0)),  # narrow output
            compiler_params=pltpu.CompilerParams(
                dimension_semantics=("parallel",),                  # megacore-shardable batch axis
                vmem_limit_bytes=32 * 1024 * 1024,
            ),
        )

    try:
        # Resident inputs never change block index -> single-buffer them (saves their
        # second VMEM buffer + a DMA descriptor each).
        out = build(pl.Buffered(1))(state, w1, w2, biases)
    except Exception:
        # Fallback if this JAX build rejects Buffered(1) for grid-based pipelining.
        out = build(None)(state, w1, w2, biases)

    # Padded batch rows (zero state) hold ReLU(bias)-derived garbage; they are sliced
    # off here and must be re-masked by any fused backward that consumes the raw output.
    probs = out[:B, :action_dim]
    value = out[:B, action_dim:action_dim + 1]
    return probs, value


def init_params(key, state_dim, action_dim, hidden_dim):
    """nn.Linear-style init (uniform(+-1/sqrt(fan_in))), weights stored [in, out]."""
    def linear(k, fan_in, fan_out):
        kw, kb = jax.random.split(k)
        bound = 1.0 / jnp.sqrt(fan_in)
        w = jax.random.uniform(kw, (fan_in, fan_out), jnp.float32, -bound, bound)
        b = jax.random.uniform(kb, (1, fan_out), jnp.float32, -bound, bound)
        return w, b

    k1, k2, k3, k4 = jax.random.split(key, 4)
    wa1, ba1 = linear(k1, state_dim, hidden_dim)
    wa2, ba2 = linear(k2, hidden_dim, action_dim)
    wc1, bc1 = linear(k3, state_dim, hidden_dim)
    wc2, bc2 = linear(k4, hidden_dim, 1)
    return dict(wa1=wa1, ba1=ba1, wa2=wa2, ba2=ba2,
                wc1=wc1, bc1=bc1, wc2=wc2, bc2=bc2)


def reference_forward(state, p):
    """Pure-JAX reference matching the PyTorch module semantics (HIGHEST-precision dots)."""
    hi = lax.Precision.HIGHEST
    h_a = jnp.maximum(jnp.dot(state, p["wa1"], precision=hi) + p["ba1"], 0.0)
    probs = jax.nn.softmax(jnp.dot(h_a, p["wa2"], precision=hi) + p["ba2"], axis=-1)
    h_c = jnp.maximum(jnp.dot(state, p["wc1"], precision=hi) + p["bc1"], 0.0)
    value = jnp.dot(h_c, p["wc2"], precision=hi) + p["bc2"]
    return probs, value


if __name__ == "__main__":
    batch, state_dim, action_dim, hidden_dim = 8, 16, 4, 32

    key = jax.random.PRNGKey(0)
    k_state, k_params, k_big = jax.random.split(key, 3)
    state = jax.random.normal(k_state, (batch, state_dim), jnp.float32)
    raw = init_params(k_params, state_dim, action_dim, hidden_dim)
    ref_probs, ref_value = reference_forward(state, raw)

    # --- f32 parameters (default path) ---
    fused = fuse_params(raw, action_dim, hidden_dim, param_dtype=jnp.float32)
    probs, value = jax.block_until_ready(actor_critic_forward(state, fused))

    assert probs.shape == (batch, action_dim)
    assert value.shape == (batch, 1)
    assert jnp.allclose(probs, ref_probs, atol=5e-3), "probs mismatch"
    assert jnp.allclose(value, ref_value, atol=1e-2), "value mismatch"
    assert jnp.allclose(jnp.sum(probs, axis=-1), 1.0, atol=1e-4), "probs do not sum to 1"

    # --- multi-tile + batch-padding path (exercises grid pipelining & row padding) ---
    big_state = jax.random.normal(k_big, (300, state_dim), jnp.float32)
    bp, bv = jax.block_until_ready(actor_critic_forward(big_state, fused, tile_b=128))
    rp, rv = reference_forward(big_state, raw)
    assert bp.shape == (300, action_dim) and bv.shape == (300, 1)
    assert jnp.allclose(bp, rp, atol=5e-3)
    assert jnp.allclose(bv, rv, atol=1e-2)

    # --- bf16 layer-1 operands (v6e/v7x MXU-native); layer 2 stays f32 for the critic ---
    fused_bf16 = fuse_params(raw, action_dim, hidden_dim, param_dtype=jnp.bfloat16)
    probs_b, value_b = jax.block_until_ready(actor_critic_forward(state, fused_bf16))
    assert jnp.allclose(probs_b, ref_probs, atol=5e-2)
    assert jnp.allclose(value_b, ref_value, atol=5e-2)

    print("KERNEL_OK")
</pallas_src>

<mosaic_0001>
module attributes {stable_mosaic.version = 11 : i64} {
  func.func @kernel(%arg0: i32, %arg1: memref<8x16xf32, #tpu.memory_space<vmem>>, %arg2: memref<16x128xf32, #tpu.memory_space<vmem>>, %arg3: memref<128x8xf32, #tpu.memory_space<vmem>>, %arg4: memref<2x128xf32, #tpu.memory_space<vmem>>, %arg5: memref<8x8xf32, #tpu.memory_space<vmem>>) attributes {dimension_semantics = [#tpu.dimension_semantics<parallel>], iteration_bounds = array<i64: 1>, scalar_prefetch = 0 : i64, scratch_operands = 0 : i64, tpu.core_type = #tpu.core_type<tc>, window_params = [{transform_indices = @transform_0, window_bounds = array<i64: 8, 16>}, {pipeline_mode = #tpu.pipeline_mode<synchronous>, transform_indices = @transform_1, window_bounds = array<i64: 16, 128>}, {pipeline_mode = #tpu.pipeline_mode<synchronous>, transform_indices = @transform_2, window_bounds = array<i64: 128, 8>}, {pipeline_mode = #tpu.pipeline_mode<synchronous>, transform_indices = @transform_3, window_bounds = array<i64: 2, 128>}, {transform_indices = @transform_4, window_bounds = array<i64: 8, 8>}]} {
    %c0 = arith.constant 0 : index
    %c0_0 = arith.constant 0 : index
    %0 = vector.load %arg1[%c0, %c0_0] : memref<8x16xf32, #tpu.memory_space<vmem>>, vector<8x16xf32>
    %c0_1 = arith.constant 0 : index
    %c0_2 = arith.constant 0 : index
    %1 = vector.load %arg2[%c0_1, %c0_2] : memref<16x128xf32, #tpu.memory_space<vmem>>, vector<16x128xf32>
    %cst = arith.constant dense<0.000000e+00> : vector<8x128xf32>
    %2 = tpu.matmul %0, %1, %cst {dimension_numbers = #tpu.dot_dimension_numbers<[1], [0], [0], [1], [0, 0, 1, 1], [], []>} : vector<8x16xf32>, vector<16x128xf32>, vector<8x128xf32> -> vector<8x128xf32>
    %c0_3 = arith.constant 0 : index
    %c0_4 = arith.constant 0 : index
    %3 = vector.load %arg4[%c0_3, %c0_4] : memref<2x128xf32, #tpu.memory_space<vmem>>, vector<1x128xf32>
    %4 = vector.broadcast %3 : vector<1x128xf32> to vector<8x128xf32>
    %5 = arith.addf %2, %4 : vector<8x128xf32>
    %cst_5 = arith.constant 0.000000e+00 : f32
    %6 = vector.broadcast %cst_5 : f32 to vector<8x128xf32>
    %7 = arith.maximumf %5, %6 : vector<8x128xf32>
    %c0_6 = arith.constant 0 : index
    %c0_7 = arith.constant 0 : index
    %8 = vector.load %arg3[%c0_6, %c0_7] : memref<128x8xf32, #tpu.memory_space<vmem>>, vector<128x8xf32>
    %cst_8 = arith.constant dense<0.000000e+00> : vector<8x8xf32>
    %9 = tpu.matmul %7, %8, %cst_8 {dimension_numbers = #tpu.dot_dimension_numbers<[1], [0], [0], [1], [0, 0, 1, 1], [], []>} : vector<8x128xf32>, vector<128x8xf32>, vector<8x8xf32> -> vector<8x8xf32>
    %c1 = arith.constant 1 : index
    %c0_9 = arith.constant 0 : index
    %10 = vector.load %arg4[%c1, %c0_9] : memref<2x128xf32, #tpu.memory_space<vmem>>, vector<1x8xf32>
    %11 = vector.broadcast %10 : vector<1x8xf32> to vector<8x8xf32>
    %12 = arith.addf %9, %11 : vector<8x8xf32>
    %13 = tpu.iota {dimensions = array<i32: 1>} : vector<1x8xi32>
    %c4_i32 = arith.constant 4 : i32
    %14 = vector.broadcast %c4_i32 : i32 to vector<1x8xi32>
    %15 = arith.cmpi slt, %13, %14 : vector<1x8xi32>
    %cst_10 = arith.constant 0xFF800000 : f32
    %16 = vector.shape_cast %15 : vector<1x8xi1> to vector<1x8xi1>
    %17 = vector.broadcast %16 : vector<1x8xi1> to vector<8x8xi1>
    %18 = vector.broadcast %cst_10 : f32 to vector<8x8xf32>
    %19 = arith.select %17, %12, %18 : vector<8x8xi1>, vector<8x8xf32>
    %cst_11 = arith.constant dense<0xFF800000> : vector<8xf32>
    %20 = vector.multi_reduction <maximumf>, %19, %cst_11 [1] : vector<8x8xf32> to vector<8xf32>
    %21 = vector.shape_cast %20 : vector<8xf32> to vector<8x1xf32>
    %22 = vector.broadcast %21 : vector<8x1xf32> to vector<8x8xf32>
    %23 = arith.subf %19, %22 : vector<8x8xf32>
    %24 = math.exp %23 : vector<8x8xf32>
    %cst_12 = arith.constant dense<0.000000e+00> : vector<8xf32>
    %25 = vector.multi_reduction <add>, %24, %cst_12 [1] : vector<8x8xf32> to vector<8xf32>
    %26 = vector.shape_cast %25 : vector<8xf32> to vector<8x1xf32>
    %27 = vector.broadcast %26 : vector<8x1xf32> to vector<8x8xf32>
    %28 = arith.divf %24, %27 : vector<8x8xf32>
    %c4_i32_13 = arith.constant 4 : i32
    %29 = vector.broadcast %c4_i32_13 : i32 to vector<1x8xi32>
    %30 = arith.cmpi eq, %13, %29 : vector<1x8xi32>
    %31 = vector.shape_cast %30 : vector<1x8xi1> to vector<1x8xi1>
    %32 = vector.broadcast %31 : vector<1x8xi1> to vector<8x8xi1>
    %33 = arith.select %32, %12, %28 : vector<8x8xi1>, vector<8x8xf32>
    %c0_14 = arith.constant 0 : index
    %c0_15 = arith.constant 0 : index
    %34 = vector.load %arg5[%c0_14, %c0_15] : memref<8x8xf32, #tpu.memory_space<vmem>>, vector<8x8xf32>
    tpu.vector_store %arg5[%c0_14, %c0_15], %33 {strides = array<i32>} : memref<8x8xf32, #tpu.memory_space<vmem>>, vector<8x8xf32>,
    return
  }
  func.func @transform_0(%arg0: i32) -> (i32, i32) {
    %c0_i32 = arith.constant 0 : i32
    %c0_i32_0 = arith.constant 0 : i32
    return %arg0, %c0_i32 : i32, i32
  }
  func.func @transform_1(%arg0: i32) -> (i32, i32) {
    %c0_i32 = arith.constant 0 : i32
    %c0_i32_0 = arith.constant 0 : i32
    %c0_i32_1 = arith.constant 0 : i32
    return %c0_i32, %c0_i32_0 : i32, i32
  }
  func.func @transform_2(%arg0: i32) -> (i32, i32) {
    %c0_i32 = arith.constant 0 : i32
    %c0_i32_0 = arith.constant 0 : i32
    %c0_i32_1 = arith.constant 0 : i32
    return %c0_i32, %c0_i32_0 : i32, i32
  }
  func.func @transform_3(%arg0: i32) -> (i32, i32) {
    %c0_i32 = arith.constant 0 : i32
    %c0_i32_0 = arith.constant 0 : i32
    %c0_i32_1 = arith.constant 0 : i32
    return %c0_i32, %c0_i32_0 : i32, i32
  }
  func.func @transform_4(%arg0: i32) -> (i32, i32) {
    %c0_i32 = arith.constant 0 : i32
    %c0_i32_0 = arith.constant 0 : i32
    return %arg0, %c0_i32 : i32, i32
  }
}

module attributes {stable_mosaic.version = 11 : i64} {
  func.func @kernel(%arg0: i32, %arg1: memref<8x16xf32, #tpu.memory_space<vmem>>, %arg2: memref<16x128xf32, #tpu.memory_space<vmem>>, %arg3: memref<128x8xf32, #tpu.memory_space<vmem>>, %arg4: memref<2x128xf32, #tpu.memory_space<vmem>>, %arg5: memref<8x8xf32, #tpu.memory_space<vmem>>) attributes {dimension_semantics = [#tpu.dimension_semantics<parallel>], iteration_bounds = array<i64: 1>, scalar_prefetch = 0 : i64, scratch_operands = 0 : i64, tpu.core_type = #tpu.core_type<tc>, window_params = [{transform_indices = @transform_0, window_bounds = array<i64: 8, 16>}, {pipeline_mode = #tpu.pipeline_mode<synchronous>, transform_indices = @transform_1, window_bounds = array<i64: 16, 128>}, {pipeline_mode = #tpu.pipeline_mode<synchronous>, transform_indices = @transform_2, window_bounds = array<i64: 128, 8>}, {pipeline_mode = #tpu.pipeline_mode<synchronous>, transform_indices = @transform_3, window_bounds = array<i64: 2, 128>}, {transform_indices = @transform_4, window_bounds = array<i64: 8, 8>}]} {
    %c0 = arith.constant 0 : index
    %c0_0 = arith.constant 0 : index
    %0 = vector.load %arg1[%c0, %c0_0] : memref<8x16xf32, #tpu.memory_space<vmem>>, vector<8x16xf32>
    %c0_1 = arith.constant 0 : index
    %c0_2 = arith.constant 0 : index
    %1 = vector.load %arg2[%c0_1, %c0_2] : memref<16x128xf32, #tpu.memory_space<vmem>>, vector<16x128xf32>
    %cst = arith.constant dense<0.000000e+00> : vector<8x128xf32>
    %2 = tpu.matmul %0, %1, %cst {dimension_numbers = #tpu.dot_dimension_numbers<[1], [0], [0], [1], [0, 0, 1, 1], [], []>} : vector<8x16xf32>, vector<16x128xf32>, vector<8x128xf32> -> vector<8x128xf32>
    %c0_3 = arith.constant 0 : index
    %c0_4 = arith.constant 0 : index
    %3 = vector.load %arg4[%c0_3, %c0_4] : memref<2x128xf32, #tpu.memory_space<vmem>>, vector<1x128xf32>
    %4 = vector.broadcast %3 : vector<1x128xf32> to vector<8x128xf32>
    %5 = arith.addf %2, %4 : vector<8x128xf32>
    %cst_5 = arith.constant 0.000000e+00 : f32
    %6 = vector.broadcast %cst_5 : f32 to vector<8x128xf32>
    %7 = arith.maximumf %5, %6 : vector<8x128xf32>
    %c0_6 = arith.constant 0 : index
    %c0_7 = arith.constant 0 : index
    %8 = vector.load %arg3[%c0_6, %c0_7] : memref<128x8xf32, #tpu.memory_space<vmem>>, vector<128x8xf32>
    %cst_8 = arith.constant dense<0.000000e+00> : vector<8x8xf32>
    %9 = tpu.matmul %7, %8, %cst_8 {dimension_numbers = #tpu.dot_dimension_numbers<[1], [0], [0], [1], [0, 0, 1, 1], [], []>} : vector<8x128xf32>, vector<128x8xf32>, vector<8x8xf32> -> vector<8x8xf32>
    %c1 = arith.constant 1 : index
    %c0_9 = arith.constant 0 : index
    %10 = vector.load %arg4[%c1, %c0_9] : memref<2x128xf32, #tpu.memory_space<vmem>>, vector<1x8xf32>
    %11 = vector.broadcast %10 : vector<1x8xf32> to vector<8x8xf32>
    %12 = arith.addf %9, %11 : vector<8x8xf32>
    %13 = tpu.iota {dimensions = array<i32: 1>} : vector<1x8xi32>
    %c4_i32 = arith.constant 4 : i32
    %14 = vector.broadcast %c4_i32 : i32 to vector<1x8xi32>
    %15 = arith.cmpi slt, %13, %14 : vector<1x8xi32>
    %cst_10 = arith.constant 0xFF800000 : f32
    %16 = vector.shape_cast %15 : vector<1x8xi1> to vector<1x8xi1>
    %17 = vector.broadcast %16 : vector<1x8xi1> to vector<8x8xi1>
    %18 = vector.broadcast %cst_10 : f32 to vector<8x8xf32>
    %19 = arith.select %17, %12, %18 : vector<8x8xi1>, vector<8x8xf32>
    %cst_11 = arith.constant dense<0xFF800000> : vector<8xf32>
    %20 = vector.multi_reduction <maximumf>, %19, %cst_11 [1] : vector<8x8xf32> to vector<8xf32>
    %21 = vector.shape_cast %20 : vector<8xf32> to vector<8x1xf32>
    %22 = vector.broadcast %21 : vector<8x1xf32> to vector<8x8xf32>
    %23 = arith.subf %19, %22 : vector<8x8xf32>
    %24 = math.exp %23 : vector<8x8xf32>
    %cst_12 = arith.constant dense<0.000000e+00> : vector<8xf32>
    %25 = vector.multi_reduction <add>, %24, %cst_12 [1] : vector<8x8xf32> to vector<8xf32>
    %26 = vector.shape_cast %25 : vector<8xf32> to vector<8x1xf32>
    %27 = vector.broadcast %26 : vector<8x1xf32> to vector<8x8xf32>
    %28 = arith.divf %24, %27 : vector<8x8xf32>
    %c4_i32_13 = arith.constant 4 : i32
    %29 = vector.broadcast %c4_i32_13 : i32 to vector<1x8xi32>
    %30 = arith.cmpi eq, %13, %29 : vector<1x8xi32>
    %31 = vector.shape_cast %30 : vector<1x8xi1> to vector<1x8xi1>
    %32 = vector.broadcast %31 : vector<1x8xi1> to vector<8x8xi1>
    %33 = arith.select %32, %12, %28 : vector<8x8xi1>, vector<8x8xf32>
    %c0_14 = arith.constant 0 : index
    %c0_15 = arith.constant 0 : index
    %34 = vector.load %arg5[%c0_14, %c0_15] : memref<8x8xf32, #tpu.memory_space<vmem>>, vector<8x8xf32>
    tpu.vector_store %arg5[%c0_14, %c0_15], %33 {strides = array<i32>} : memref<8x8xf32, #tpu.memory_space<vmem>>, vector<8x8xf32>,
    return
  }
  func.func @transform_0(%arg0: i32) -> (i32, i32) {
    %c0_i32 = arith.constant 0 : i32
    %c0_i32_0 = arith.constant 0 : i32
    return %arg0, %c0_i32 : i32, i32
  }
  func.func @transform_1(%arg0: i32) -> (i32, i32) {
    %c0_i32 = arith.constant 0 : i32
    %c0_i32_0 = arith.constant 0 : i32
    %c0_i32_1 = arith.constant 0 : i32
    return %c0_i32, %c0_i32_0 : i32, i32
  }
  func.func @transform_2(%arg0: i32) -> (i32, i32) {
    %c0_i32 = arith.constant 0 : i32
    %c0_i32_0 = arith.constant 0 : i32
    %c0_i32_1 = arith.constant 0 : i32
    return %c0_i32, %c0_i32_0 : i32, i32
  }
  func.func @transform_3(%arg0: i32) -> (i32, i32) {
    %c0_i32 = arith.constant 0 : i32
    %c0_i32_0 = arith.constant 0 : i32
    %c0_i32_1 = arith.constant 0 : i32
    return %c0_i32, %c0_i32_0 : i32, i32
  }
  func.func @transform_4(%arg0: i32) -> (i32, i32) {
    %c0_i32 = arith.constant 0 : i32
    %c0_i32_0 = arith.constant 0 : i32
    return %arg0, %c0_i32 : i32, i32
  }
}

</mosaic_0001>

<llo_original>
// kernel: tpu_custom_call.1
$region0: #{tpu_custom_call.1}
  #allocation0 [shape = 'u32[]', space=smem, size = 0x4, offset = 0x4, fixed_abs, tag = 'smem constant byte address 0x4 - core index']
  #allocation1 [shape = 'u32[144,128]{1,0:T(1,128)}', space=vmem, size = 0x12000, scoped, tag = 'internal scratch']
  %s0 = inlined_call_operand.vmem [shape: f32[8,16], index: 0, kind: input, shape index: {}]
  %s1 = inlined_call_operand.vmem [shape: f32[16,128], index: 1, kind: input, shape index: {}]
  %s2 = inlined_call_operand.vmem [shape: f32[128,8], index: 2, kind: input, shape index: {}]
  %s3 = inlined_call_operand.vmem [shape: f32[2,128], index: 3, kind: input, shape index: {}]
  %s4 = inlined_call_operand.hbm [shape: f32[8,8], index: 4, kind: output, shape index: {}]
  %s5 = sld [smem:[#allocation0]]
  $region26: #{tpu_custom_call.1} parent=0
    _
  %s7 = ssub.s32 1, %s5
  %s8 = scalar_select 0, %s7, %s5
  $region1: #{tpu_custom_call.1} parent=0
    #allocation2 [shape = 'u8[4096]{0}', space=vmem, size = 0x1000, scoped, tag = 'output window, operand 0, single buffered']
    #allocation3 [shape = 's32[1]{0}', space=sflag, size = 0x4, scoped, tag = 'scoped memory for tpu_custom_call.1']
    %9 = vsyncpa [#allocation3], 0
    // Predicated region
    $region2: #{tpu_custom_call.1} parent=1 // pred_check
      _
    $region3: #{tpu_custom_call.1} parent=1 // pred_check_branch
      %11 = sbr.rel (0) target = $region5
    $region4: #{tpu_custom_call.1} parent=1 // pred_region
      _
    $region5: #{tpu_custom_call.1} parent=1 // pred_fallthru
      _
    // Predicated region
    $region6: #{tpu_custom_call.1} parent=1 // pred_check
      _
    $region7: #{tpu_custom_call.1} parent=1 // pred_check_branch
      %13 = sbr.rel (0) target = $region9
    $region8: #{tpu_custom_call.1} parent=1 // pred_region
      _
    $region9: #{tpu_custom_call.1} parent=1 // pred_fallthru
      _
    // Predicated region
    $region10: #{tpu_custom_call.1} parent=1 // pred_check
      _
    $region11: #{tpu_custom_call.1} parent=1 // pred_check_branch
      %15 = sbr.rel (0) target = $region13
    $region12: #{tpu_custom_call.1} parent=1 // pred_region
      _
    $region13: #{tpu_custom_call.1} parent=1 // pred_fallthru
      _
    // Predicated region
    $region14: #{tpu_custom_call.1} parent=1 // pred_check
      _
    $region15: #{tpu_custom_call.1} parent=1 // pred_check_branch
      %17 = sbr.rel (0) target = $region17
    $region16: #{tpu_custom_call.1} parent=1 // pred_region
      _
    $region17: #{tpu_custom_call.1} parent=1 // pred_fallthru
      _
    %v18 = vld [vmem:[%s0] sm:$0xff]
    %v19 = vld [vmem:[%s1] sm:$0xff]
    %v20 = vld [vmem:[%s1 + $0x8] sm:$0xff]
    %v21 = vld [vmem:[%s3] sm:$0x1]
    %v22 = vlaneseq
    %v23 = vshrl.u32 %v22, 7
    %v24 = vsub.s32 0, %v23
    %v25 = vrot.slane %v21, %v24
    %vm26 = vcmask 130048
    %v28 = vsel %vm26, %v18, 0
    %30 = vmatprep.subr.mxu0 0.0
    %31 = vmatpush1.msra.mxu0 0.0
    %32 = vmatprep.subr.mxu0 0.0
    %33 = vmatpush1.msra.mxu0 0.0
    %34 = vmatprep.subr.mxu0 0.0
    %35 = vmatpush1.msra.mxu0 0.0
    %36 = vmatprep.subr.mxu0 0.0
    %37 = vmatpush1.msra.mxu0 0.0
    %38 = vmatprep.subr.mxu0 0.0
    %39 = vmatpush1.msra.mxu0 0.0
    %40 = vmatprep.subr.mxu0 0.0
    %41 = vmatpush1.msra.mxu0 0.0
    %42 = vmatprep.subr.mxu0 0.0
    %43 = vmatpush1.msra.mxu0 0.0
    %44 = vmatprep.subr.mxu0 0.0
    %45 = vmatpush1.msra.mxu0 0.0
    %46 = vmatprep.subr.mxu0 0.0
    %47 = vmatpush1.msra.mxu0 0.0
    %48 = vmatprep.subr.mxu0 0.0
    %49 = vmatpush1.msra.mxu0 0.0
    %50 = vmatprep.subr.mxu0 0.0
    %51 = vmatpush1.msra.mxu0 0.0
    %52 = vmatprep.subr.mxu0 0.0
    %53 = vmatpush1.msra.mxu0 0.0
    %54 = vmatprep.subr.mxu0 0.0
    %55 = vmatpush1.msra.mxu0 0.0
    %56 = vmatprep.subr.mxu0 0.0
    %57 = vmatpush1.msra.mxu0 0.0
    %58 = vmatprep.subr.mxu0 0.0
    %59 = vmatpush1.msra.mxu0 %v20
    %60 = vmatprep.subr.mxu0 0.0
    %61 = vmatpush1.msra.mxu0 %v19
    %62 = vmatprep.subr.mxu0 0.0
    %63 = vmatpush2.msra.mxu0 0.0
    %64 = vmatprep.subr.mxu0 0.0
    %65 = vmatpush2.msra.mxu0 0.0
    %66 = vmatprep.subr.mxu0 0.0
    %67 = vmatpush2.msra.mxu0 0.0
    %68 = vmatprep.subr.mxu0 0.0
    %69 = vmatpush2.msra.mxu0 0.0
    %70 = vmatprep.subr.mxu0 0.0
    %71 = vmatpush2.msra.mxu0 0.0
    %72 = vmatprep.subr.mxu0 0.0
    %73 = vmatpush2.msra.mxu0 0.0
    %74 = vmatprep.subr.mxu0 0.0
    %75 = vmatpush2.msra.mxu0 0.0
    %76 = vmatprep.subr.mxu0 0.0
    %77 = vmatpush2.msra.mxu0 0.0
    %78 = vmatprep.subr.mxu0 0.0
    %79 = vmatpush2.msra.mxu0 0.0
    %80 = vmatprep.subr.mxu0 0.0
    %81 = vmatpush2.msra.mxu0 0.0
    %82 = vmatprep.subr.mxu0 0.0
    %83 = vmatpush2.msra.mxu0 0.0
    %84 = vmatprep.subr.mxu0 0.0
    %85 = vmatpush2.msra.mxu0 0.0
    %86 = vmatprep.subr.mxu0 0.0
    %87 = vmatpush2.msra.mxu0 0.0
    %88 = vmatprep.subr.mxu0 0.0
    %89 = vmatpush2.msra.mxu0 0.0
    %90 = vmatprep.subr.mxu0 0.0
    %91 = vmatpush2.msra.mxu0 0.0
    %92 = vmatprep.subr.mxu0 0.0
    %93 = vmatpush2.msra.mxu0 0.0
    %94 = vmatprep.mubr.f32.mxu0 0.0
    %95 = vmatmul.mubr.f32.gmra.mxu0 %v28
    %v96 = vpop.f32.mrf.mxu0
    %v97 = vadd.f32 %v25, %v96
    %v98 = vpop.f32.mrf.mxu0
    %99 = vdwg.mxu0
    %v100 = vmax.f32 %v97, 0.0
    %v101 = vld [vmem:[%s2] sm:$0xff]
    %v102 = vld [vmem:[%s2 + $0x8] sm:$0xff]
    %v103 = vld [vmem:[%s2 + $0x10] sm:$0xff]
    %v104 = vld [vmem:[%s2 + $0x18] sm:$0xff]
    %v105 = vld [vmem:[%s2 + $0x20] sm:$0xff]
    %v106 = vld [vmem:[%s2 + $0x28] sm:$0xff]
    %v107 = vld [vmem:[%s2 + $0x30] sm:$0xff]
    %v108 = vld [vmem:[%s2 + $0x38] sm:$0xff]
    %v109 = vld [vmem:[%s2 + $0x40] sm:$0xff]
    %v110 = vld [vmem:[%s2 + $0x48] sm:$0xff]
    %v111 = vld [vmem:[%s2 + $0x50] sm:$0xff]
    %v112 = vld [vmem:[%s2 + $0x58] sm:$0xff]
    %v113 = vld [vmem:[%s2 + $0x60] sm:$0xff]
    %v114 = vld [vmem:[%s2 + $0x68] sm:$0xff]
    %v115 = vld [vmem:[%s2 + $0x70] sm:$0xff]
    %v116 = vld [vmem:[%s2 + $0x78] sm:$0xff]
    %v117 = vld [vmem:[%s3 + $0x1] sm:$0x1]
    %v118 = vlaneseq
    %v119 = vshrl.u32 %v118, 7
    %v120 = vsub.s32 0, %v119
    %v121 = vrot.slane %v117, %v120
    %122 = vmatprep.subr.mxu0 0.0
    %123 = vmatpush1.msra.mxu0 %v116
    %124 = vmatprep.subr.mxu0 0.0
    %125 = vmatpush1.msra.mxu0 %v115
    %126 = vmatprep.subr.mxu0 0.0
    %127 = vmatpush1.msra.mxu0 %v114
    %128 = vmatprep.subr.mxu0 0.0
    %129 = vmatpush1.msra.mxu0 %v113
    %130 = vmatprep.subr.mxu0 0.0
    %131 = vmatpush1.msra.mxu0 %v112
    %132 = vmatprep.subr.mxu0 0.0
    %133 = vmatpush1.msra.mxu0 %v111
    %134 = vmatprep.subr.mxu0 0.0
    %135 = vmatpush1.msra.mxu0 %v110
    %136 = vmatprep.subr.mxu0 0.0
    %137 = vmatpush1.msra.mxu0 %v109
    %138 = vmatprep.subr.mxu0 0.0
    %139 = vmatpush1.msra.mxu0 %v108
    %140 = vmatprep.subr.mxu0 0.0
    %141 = vmatpush1.msra.mxu0 %v107
    %142 = vmatprep.subr.mxu0 0.0
    %143 = vmatpush1.msra.mxu0 %v106
    %144 = vmatprep.subr.mxu0 0.0
    %145 = vmatpush1.msra.mxu0 %v105
    %146 = vmatprep.subr.mxu0 0.0
    %147 = vmatpush1.msra.mxu0 %v104
    %148 = vmatprep.subr.mxu0 0.0
    %149 = vmatpush1.msra.mxu0 %v103
    %150 = vmatprep.subr.mxu0 0.0
    %151 = vmatpush1.msra.mxu0 %v102
    %152 = vmatprep.subr.mxu0 0.0
    %153 = vmatpush1.msra.mxu0 %v101
    %154 = vmatprep.subr.mxu0 0.0
    %155 = vmatpush2.msra.mxu0 0.0
    %156 = vmatprep.subr.mxu0 0.0
    %157 = vmatpush2.msra.mxu0 0.0
    %158 = vmatprep.subr.mxu0 0.0
    %159 = vmatpush2.msra.mxu0 0.0
    %160 = vmatprep.subr.mxu0 0.0
    %161 = vmatpush2.msra.mxu0 0.0
    %162 = vmatprep.subr.mxu0 0.0
    %163 = vmatpush2.msra.mxu0 0.0
    %164 = vmatprep.subr.mxu0 0.0
    %165 = vmatpush2.msra.mxu0 0.0
    %166 = vmatprep.subr.mxu0 0.0
    %167 = vmatpush2.msra.mxu0 0.0
    %168 = vmatprep.subr.mxu0 0.0
    %169 = vmatpush2.msra.mxu0 0.0
    %170 = vmatprep.subr.mxu0 0.0
    %171 = vmatpush2.msra.mxu0 0.0
    %172 = vmatprep.subr.mxu0 0.0
    %173 = vmatpush2.msra.mxu0 0.0
    %174 = vmatprep.subr.mxu0 0.0
    %175 = vmatpush2.msra.mxu0 0.0
    %176 = vmatprep.subr.mxu0 0.0
    %177 = vmatpush2.msra.mxu0 0.0
    %178 = vmatprep.subr.mxu0 0.0
    %179 = vmatpush2.msra.mxu0 0.0
    %180 = vmatprep.subr.mxu0 0.0
    %181 = vmatpush2.msra.mxu0 0.0
    %182 = vmatprep.subr.mxu0 0.0
    %183 = vmatpush2.msra.mxu0 0.0
    %184 = vmatprep.subr.mxu0 0.0
    %185 = vmatpush2.msra.mxu0 0.0
    %186 = vmatprep.mubr.f32.mxu0 0.0
    %187 = vmatmul.mubr.f32.gmra.mxu0 %v100
    %v188 = vpop.f32.mrf.mxu0
    %v189 = vadd.f32 %v121, %v188
    %v190 = vpop.f32.mrf.mxu0
    %191 = vdwg.mxu0
    %v192 = vlaneseq
    %v193 = vand.u32 %v192, 127
    %vm194 = vcmp.lt.s32.totalorder %v193, 4
    %v195 = vsel %vm194, 1, 0
    %vm196 = vcmp.eq.s32.totalorder %v195, 1
    %v197 = vsel %vm196, %v189, -inf
    %vm198 = vcmask 64512
    %v199 = vsel %vm198, %v197, -inf
    %200 = vmax.xlane.f32.xlu0 %v199
    %v201 = vpop.xlane.xlu0 %200
    %v202 = vsub.f32 %v197, %v201
    %v203 = vmul.f32 %v202, 1.442695
    %v204 = vpow.pop %v203
    %v205 = vsel %vm198, %v204, 0.0
    %206 = vadd.xlane.f32.xlu0 %v205
    %v207 = vpop.xlane.xlu0 %206
    %v208 = vrcp.pop %v207
    %v209 = vmul.f32 %v204, %v208
    %vm210 = vcmp.eq.s32.totalorder %v193, 4
    %v211 = vsel %vm210, 1, 0
    %vm212 = vcmp.eq.s32.totalorder %v211, 1
    %v213 = vsel %vm212, %v189, %v209
    %214 = vst.msk [vmem:[#allocation2] sm:$0xff] %vm198, %v213
    // Predicated region
    $region18: #{tpu_custom_call.1} parent=1 // pred_check
      _
    $region19: #{tpu_custom_call.1} parent=1 // pred_check_branch
      %216 = sbr.rel (0) target = $region21
    $region20: #{tpu_custom_call.1} parent=1 // pred_region
      %s218 = ssub.s32 128, 128
      %219 = vsyncadd [#allocation3], %s218
      %s221 = sshll.u32 [#allocation2], 4
      %s222 = int_to_ptr.vmem [resolvable:$true] %s221
      %224 = dma.vmem_to_hbm [thread:$0]  %s222, 128, %s4, [#allocation3]
    $region21: #{tpu_custom_call.1} parent=1 // pred_fallthru
      _
    // Predicated region
    $region22: #{tpu_custom_call.1} parent=1 // pred_check
      _
    $region23: #{tpu_custom_call.1} parent=1 // pred_check_branch
      %226 = sbr.rel (0) target = $region25
    $region24: #{tpu_custom_call.1} parent=1 // pred_region
      %227 = dma.done [#allocation3], 128
    $region25: #{tpu_custom_call.1} parent=1 // pred_fallthru
      _
    %228 = vsyncpa [#allocation3], 1

// kernel: tpu_custom_call.1
$region0: #{tpu_custom_call.1}
  #allocation0 [shape = 'u32[]', space=smem, size = 0x4, offset = 0x4, fixed_abs, tag = 'smem constant byte address 0x4 - core index']
  #allocation1 [shape = 'u32[144,128]{1,0:T(1,128)}', space=vmem, size = 0x12000, scoped, tag = 'internal scratch']
  %s0 = inlined_call_operand.vmem [shape: f32[8,16], index: 0, kind: input, shape index: {}]
  %s1 = inlined_call_operand.vmem [shape: f32[16,128], index: 1, kind: input, shape index: {}]
  %s2 = inlined_call_operand.vmem [shape: f32[128,8], index: 2, kind: input, shape index: {}]
  %s3 = inlined_call_operand.vmem [shape: f32[2,128], index: 3, kind: input, shape index: {}]
  %s4 = inlined_call_operand.hbm [shape: f32[8,8], index: 4, kind: output, shape index: {}]
  %s5 = sld [smem:[#allocation0]]
  $region26: #{tpu_custom_call.1} parent=0
    _
  %s7 = ssub.s32 1, %s5
  %s8 = scalar_select 0, %s7, %s5
  $region1: #{tpu_custom_call.1} parent=0
    #allocation2 [shape = 'u8[4096]{0}', space=vmem, size = 0x1000, scoped, tag = 'output window, operand 0, single buffered']
    #allocation3 [shape = 's32[1]{0}', space=sflag, size = 0x4, scoped, tag = 'scoped memory for tpu_custom_call.1']
    %9 = vsyncpa [#allocation3], 0
    // Predicated region
    $region2: #{tpu_custom_call.1} parent=1 // pred_check
      _
    $region3: #{tpu_custom_call.1} parent=1 // pred_check_branch
      %11 = sbr.rel (0) target = $region5
    $region4: #{tpu_custom_call.1} parent=1 // pred_region
      _
    $region5: #{tpu_custom_call.1} parent=1 // pred_fallthru
      _
    // Predicated region
    $region6: #{tpu_custom_call.1} parent=1 // pred_check
      _
    $region7: #{tpu_custom_call.1} parent=1 // pred_check_branch
      %13 = sbr.rel (0) target = $region9
    $region8: #{tpu_custom_call.1} parent=1 // pred_region
      _
    $region9: #{tpu_custom_call.1} parent=1 // pred_fallthru
      _
    // Predicated region
    $region10: #{tpu_custom_call.1} parent=1 // pred_check
      _
    $region11: #{tpu_custom_call.1} parent=1 // pred_check_branch
      %15 = sbr.rel (0) target = $region13
    $region12: #{tpu_custom_call.1} parent=1 // pred_region
      _
    $region13: #{tpu_custom_call.1} parent=1 // pred_fallthru
      _
    // Predicated region
    $region14: #{tpu_custom_call.1} parent=1 // pred_check
      _
    $region15: #{tpu_custom_call.1} parent=1 // pred_check_branch
      %17 = sbr.rel (0) target = $region17
    $region16: #{tpu_custom_call.1} parent=1 // pred_region
      _
    $region17: #{tpu_custom_call.1} parent=1 // pred_fallthru
      _
    %v18 = vld [vmem:[%s0] sm:$0xff]
    %v19 = vld [vmem:[%s1] sm:$0xff]
    %v20 = vld [vmem:[%s1 + $0x8] sm:$0xff]
    %v21 = vld [vmem:[%s3] sm:$0x1]
    %v22 = vlaneseq
    %v23 = vshrl.u32 %v22, 7
    %v24 = vsub.s32 0, %v23
    %v25 = vrot.slane %v21, %v24
    %vm26 = vcmask 130048
    %v28 = vsel %vm26, %v18, 0
    %30 = vmatprep.subr.mxu0 0.0
    %31 = vmatpush1.msra.mxu0 0.0
    %32 = vmatprep.subr.mxu0 0.0
    %33 = vmatpush1.msra.mxu0 0.0
    %34 = vmatprep.subr.mxu0 0.0
    %35 = vmatpush1.msra.mxu0 0.0
    %36 = vmatprep.subr.mxu0 0.0
    %37 = vmatpush1.msra.mxu0 0.0
    %38 = vmatprep.subr.mxu0 0.0
    %39 = vmatpush1.msra.mxu0 0.0
    %40 = vmatprep.subr.mxu0 0.0
    %41 = vmatpush1.msra.mxu0 0.0
    %42 = vmatprep.subr.mxu0 0.0
    %43 = vmatpush1.msra.mxu0 0.0
    %44 = vmatprep.subr.mxu0 0.0
    %45 = vmatpush1.msra.mxu0 0.0
    %46 = vmatprep.subr.mxu0 0.0
    %47 = vmatpush1.msra.mxu0 0.0
    %48 = vmatprep.subr.mxu0 0.0
    %49 = vmatpush1.msra.mxu0 0.0
    %50 = vmatprep.subr.mxu0 0.0
    %51 = vmatpush1.msra.mxu0 0.0
    %52 = vmatprep.subr.mxu0 0.0
    %53 = vmatpush1.msra.mxu0 0.0
    %54 = vmatprep.subr.mxu0 0.0
    %55 = vmatpush1.msra.mxu0 0.0
    %56 = vmatprep.subr.mxu0 0.0
    %57 = vmatpush1.msra.mxu0 0.0
    %58 = vmatprep.subr.mxu0 0.0
    %59 = vmatpush1.msra.mxu0 %v20
    %60 = vmatprep.subr.mxu0 0.0
    %61 = vmatpush1.msra.mxu0 %v19
    %62 = vmatprep.subr.mxu0 0.0
    %63 = vmatpush2.msra.mxu0 0.0
    %64 = vmatprep.subr.mxu0 0.0
    %65 = vmatpush2.msra.mxu0 0.0
    %66 = vmatprep.subr.mxu0 0.0
    %67 = vmatpush2.msra.mxu0 0.0
    %68 = vmatprep.subr.mxu0 0.0
    %69 = vmatpush2.msra.mxu0 0.0
    %70 = vmatprep.subr.mxu0 0.0
    %71 = vmatpush2.msra.mxu0 0.0
    %72 = vmatprep.subr.mxu0 0.0
    %73 = vmatpush2.msra.mxu0 0.0
    %74 = vmatprep.subr.mxu0 0.0
    %75 = vmatpush2.msra.mxu0 0.0
    %76 = vmatprep.subr.mxu0 0.0
    %77 = vmatpush2.msra.mxu0 0.0
    %78 = vmatprep.subr.mxu0 0.0
    %79 = vmatpush2.msra.mxu0 0.0
    %80 = vmatprep.subr.mxu0 0.0
    %81 = vmatpush2.msra.mxu0 0.0
    %82 = vmatprep.subr.mxu0 0.0
    %83 = vmatpush2.msra.mxu0 0.0
    %84 = vmatprep.subr.mxu0 0.0
    %85 = vmatpush2.msra.mxu0 0.0
    %86 = vmatprep.subr.mxu0 0.0
    %87 = vmatpush2.msra.mxu0 0.0
    %88 = vmatprep.subr.mxu0 0.0
    %89 = vmatpush2.msra.mxu0 0.0
    %90 = vmatprep.subr.mxu0 0.0
    %91 = vmatpush2.msra.mxu0 0.0
    %92 = vmatprep.subr.mxu0 0.0
    %93 = vmatpush2.msra.mxu0 0.0
    %94 = vmatprep.mubr.f32.mxu0 0.0
    %95 = vmatmul.mubr.f32.gmra.mxu0 %v28
    %v96 = vpop.f32.mrf.mxu0
    %v97 = vadd.f32 %v25, %v96
    %v98 = vpop.f32.mrf.mxu0
    %99 = vdwg.mxu0
    %v100 = vmax.f32 %v97, 0.0
    %v101 = vld [vmem:[%s2] sm:$0xff]
    %v102 = vld [vmem:[%s2 + $0x8] sm:$0xff]
    %v103 = vld [vmem:[%s2 + $0x10] sm:$0xff]
    %v104 = vld [vmem:[%s2 + $0x18] sm:$0xff]
    %v105 = vld [vmem:[%s2 + $0x20] sm:$0xff]
    %v106 = vld [vmem:[%s2 + $0x28] sm:$0xff]
    %v107 = vld [vmem:[%s2 + $0x30] sm:$0xff]
    %v108 = vld [vmem:[%s2 + $0x38] sm:$0xff]
    %v109 = vld [vmem:[%s2 + $0x40] sm:$0xff]
    %v110 = vld [vmem:[%s2 + $0x48] sm:$0xff]
    %v111 = vld [vmem:[%s2 + $0x50] sm:$0xff]
    %v112 = vld [vmem:[%s2 + $0x58] sm:$0xff]
    %v113 = vld [vmem:[%s2 + $0x60] sm:$0xff]
    %v114 = vld [vmem:[%s2 + $0x68] sm:$0xff]
    %v115 = vld [vmem:[%s2 + $0x70] sm:$0xff]
    %v116 = vld [vmem:[%s2 + $0x78] sm:$0xff]
    %v117 = vld [vmem:[%s3 + $0x1] sm:$0x1]
    %v118 = vlaneseq
    %v119 = vshrl.u32 %v118, 7
    %v120 = vsub.s32 0, %v119
    %v121 = vrot.slane %v117, %v120
    %122 = vmatprep.subr.mxu0 0.0
    %123 = vmatpush1.msra.mxu0 %v116
    %124 = vmatprep.subr.mxu0 0.0
    %125 = vmatpush1.msra.mxu0 %v115
    %126 = vmatprep.subr.mxu0 0.0
    %127 = vmatpush1.msra.mxu0 %v114
    %128 = vmatprep.subr.mxu0 0.0
    %129 = vmatpush1.msra.mxu0 %v113
    %130 = vmatprep.subr.mxu0 0.0
    %131 = vmatpush1.msra.mxu0 %v112
    %132 = vmatprep.subr.mxu0 0.0
    %133 = vmatpush1.msra.mxu0 %v111
    %134 = vmatprep.subr.mxu0 0.0
    %135 = vmatpush1.msra.mxu0 %v110
    %136 = vmatprep.subr.mxu0 0.0
    %137 = vmatpush1.msra.mxu0 %v109
    %138 = vmatprep.subr.mxu0 0.0
    %139 = vmatpush1.msra.mxu0 %v108
    %140 = vmatprep.subr.mxu0 0.0
    %141 = vmatpush1.msra.mxu0 %v107
    %142 = vmatprep.subr.mxu0 0.0
    %143 = vmatpush1.msra.mxu0 %v106
    %144 = vmatprep.subr.mxu0 0.0
    %145 = vmatpush1.msra.mxu0 %v105
    %146 = vmatprep.subr.mxu0 0.0
    %147 = vmatpush1.msra.mxu0 %v104
    %148 = vmatprep.subr.mxu0 0.0
    %149 = vmatpush1.msra.mxu0 %v103
    %150 = vmatprep.subr.mxu0 0.0
    %151 = vmatpush1.msra.mxu0 %v102
    %152 = vmatprep.subr.mxu0 0.0
    %153 = vmatpush1.msra.mxu0 %v101
    %154 = vmatprep.subr.mxu0 0.0
    %155 = vmatpush2.msra.mxu0 0.0
    %156 = vmatprep.subr.mxu0 0.0
    %157 = vmatpush2.msra.mxu0 0.0
    %158 = vmatprep.subr.mxu0 0.0
    %159 = vmatpush2.msra.mxu0 0.0
    %160 = vmatprep.subr.mxu0 0.0
    %161 = vmatpush2.msra.mxu0 0.0
    %162 = vmatprep.subr.mxu0 0.0
    %163 = vmatpush2.msra.mxu0 0.0
    %164 = vmatprep.subr.mxu0 0.0
    %165 = vmatpush2.msra.mxu0 0.0
    %166 = vmatprep.subr.mxu0 0.0
    %167 = vmatpush2.msra.mxu0 0.0
    %168 = vmatprep.subr.mxu0 0.0
    %169 = vmatpush2.msra.mxu0 0.0
    %170 = vmatprep.subr.mxu0 0.0
    %171 = vmatpush2.msra.mxu0 0.0
    %172 = vmatprep.subr.mxu0 0.0
    %173 = vmatpush2.msra.mxu0 0.0
    %174 = vmatprep.subr.mxu0 0.0
    %175 = vmatpush2.msra.mxu0 0.0
    %176 = vmatprep.subr.mxu0 0.0
    %177 = vmatpush2.msra.mxu0 0.0
    %178 = vmatprep.subr.mxu0 0.0
    %179 = vmatpush2.msra.mxu0 0.0
    %180 = vmatprep.subr.mxu0 0.0
    %181 = vmatpush2.msra.mxu0 0.0
    %182 = vmatprep.subr.mxu0 0.0
    %183 = vmatpush2.msra.mxu0 0.0
    %184 = vmatprep.subr.mxu0 0.0
    %185 = vmatpush2.msra.mxu0 0.0
    %186 = vmatprep.mubr.f32.mxu0 0.0
    %187 = vmatmul.mubr.f32.gmra.mxu0 %v100
    %v188 = vpop.f32.mrf.mxu0
    %v189 = vadd.f32 %v121, %v188
    %v190 = vpop.f32.mrf.mxu0
    %191 = vdwg.mxu0
    %v192 = vlaneseq
    %v193 = vand.u32 %v192, 127
    %vm194 = vcmp.lt.s32.totalorder %v193, 4
    %v195 = vsel %vm194, 1, 0
    %vm196 = vcmp.eq.s32.totalorder %v195, 1
    %v197 = vsel %vm196, %v189, -inf
    %vm198 = vcmask 64512
    %v199 = vsel %vm198, %v197, -inf
    %200 = vmax.xlane.f32.xlu0 %v199
    %v201 = vpop.xlane.xlu0 %200
    %v202 = vsub.f32 %v197, %v201
    %v203 = vmul.f32 %v202, 1.442695
    %v204 = vpow.pop %v203
    %v205 = vsel %vm198, %v204, 0.0
    %206 = vadd.xlane.f32.xlu0 %v205
    %v207 = vpop.xlane.xlu0 %206
    %v208 = vrcp.pop %v207
    %v209 = vmul.f32 %v204, %v208
    %vm210 = vcmp.eq.s32.totalorder %v193, 4
    %v211 = vsel %vm210, 1, 0
    %vm212 = vcmp.eq.s32.totalorder %v211, 1
    %v213 = vsel %vm212, %v189, %v209
    %214 = vst.msk [vmem:[#allocation2] sm:$0xff] %vm198, %v213
    // Predicated region
    $region18: #{tpu_custom_call.1} parent=1 // pred_check
      _
    $region19: #{tpu_custom_call.1} parent=1 // pred_check_branch
      %216 = sbr.rel (0) target = $region21
    $region20: #{tpu_custom_call.1} parent=1 // pred_region
      %s218 = ssub.s32 128, 128
      %219 = vsyncadd [#allocation3], %s218
      %s221 = sshll.u32 [#allocation2], 4
      %s222 = int_to_ptr.vmem [resolvable:$true] %s221
      %224 = dma.vmem_to_hbm [thread:$0]  %s222, 128, %s4, [#allocation3]
    $region21: #{tpu_custom_call.1} parent=1 // pred_fallthru
      _
    // Predicated region
    $region22: #{tpu_custom_call.1} parent=1 // pred_check
      _
    $region23: #{tpu_custom_call.1} parent=1 // pred_check_branch
      %226 = sbr.rel (0) target = $region25
    $region24: #{tpu_custom_call.1} parent=1 // pred_region
      %227 = dma.done [#allocation3], 128
    $region25: #{tpu_custom_call.1} parent=1 // pred_fallthru
      _
    %228 = vsyncpa [#allocation3], 1

</llo_original>
